<compile_context>
chip_gen: v7x
topology: tpu7x:2x2x1
jax: 0.10.0
libtpu: 0.0.40
codegen_flags: <defaults>
</compile_context>

<pallas_src>
import numpy as np
import jax
import jax.numpy as jnp
from jax.experimental import pallas as pl
from jax.experimental.pallas import tpu as pltpu


def trunk_kernel(x_ref,
                 w1_ref, b1_ref, w2_ref, b2_ref, w3_ref, b3_ref,
                 w4_ref, b4_ref, w5_ref, b5_ref, w7_ref, b7_ref,
                 o_ref):
    # x_ref: [D_in, tile_n]   (features on sublanes, queries on lanes)
    # wk_ref: [out, in]  (PyTorch nn.Linear layout, scale already folded in)
    # bk_ref: [out, 1]   (broadcasts along lanes)
    x = x_ref[...]
    d_in = x.shape[0]

    # ---- layer 1: K = D_in is tiny -> broadcast FMAs on the VPU, skip the MXU.
    w1 = w1_ref[...]                                    # [H, D_in]
    acc = b1_ref[...] + w1[:, 0:1] * x[0:1, :]          # [H, tile_n]
    for k in range(1, d_in):                            # static, D_in small
        acc = acc + w1[:, k:k + 1] * x[k:k + 1, :]
    h = jnp.tanh(acc)                                                # y1

    def layer(h, w_ref, b_ref):
        # [out, in] @ [in, tile_n] -> [out, tile_n]; bias broadcasts over lanes.
        return jnp.dot(w_ref[...], h,
                       preferred_element_type=jnp.float32) + b_ref[...]

    h = jnp.tanh(layer(h, w2_ref, b2_ref))                           # y2
    h = jnp.tanh(layer(h, w3_ref, b3_ref))                           # y3
    h = jnp.tanh(layer(h, w4_ref, b4_ref))                           # y4
    h = jnp.tanh(layer(h, w5_ref, b5_ref))                           # y5 (linear5)
    h = jnp.tanh(layer(h, w5_ref, b5_ref))                           # y6 (linear5 again, as in the PyTorch forward)
    o_ref[...] = layer(h, w7_ref, b7_ref).astype(o_ref.dtype)        # y  (no tanh)
    # TODO(synk): linear6 exists in __init__ but is never used in forward; omitted.


def _pick_tile(n):
    # Biggest lane-aligned tile that still leaves >= 2 grid steps (v7x 2-TC);
    # otherwise fall back to a single full-array block (always legal).
    for t in (512, 256, 128):
        if n % t == 0 and n // t >= 2:
            return t
    return n


def trunk_net(x, params, scale):
    """x: [N, D_in]; params in PyTorch nn.Linear layout (W: [out, in], b: [out]).

    Returns y: [N, D_out] (same interface as the PyTorch module)."""
    N, D_in = x.shape
    H = params["w2"].shape[0]
    D_out = params["w7"].shape[0]

    s = jnp.reshape(jnp.asarray(scale, jnp.float32), ())

    # Fold the n*a1 scale once, wrapper-side:  s*(Wx+b) == (sW)x + (sb).
    def w(name):
        return (s * params[name]).astype(jnp.float32)

    def b(name, out_dim):
        return (s * params[name]).astype(jnp.float32).reshape(out_dim, 1)

    x_t = x.astype(jnp.float32).T                        # [D_in, N], N on lanes

    tile_n = _pick_tile(N)
    grid = (N // tile_n,)

    def const_spec(shape):
        # Whole (tiny) weight/bias resident in VMEM; constant index_map
        # suppresses re-DMA after the first grid step.
        return pl.BlockSpec(shape, lambda i: (0, 0))

    in_specs = [
        pl.BlockSpec((D_in, tile_n), lambda i: (0, i)),   # x^T
        const_spec((H, D_in)),  const_spec((H, 1)),       # w1, b1
        const_spec((H, H)),     const_spec((H, 1)),       # w2, b2
        const_spec((H, H)),     const_spec((H, 1)),       # w3, b3
        const_spec((H, H)),     const_spec((H, 1)),       # w4, b4
        const_spec((H, H)),     const_spec((H, 1)),       # w5, b5
        const_spec((D_out, H)), const_spec((D_out, 1)),   # w7, b7
    ]
    out_specs = pl.BlockSpec((D_out, tile_n), lambda i: (0, i))

    y_t = pl.pallas_call(
        trunk_kernel,
        out_shape=jax.ShapeDtypeStruct((D_out, N), jnp.float32),
        grid_spec=pltpu.PrefetchScalarGridSpec(
            num_scalar_prefetch=0,
            grid=grid,
            in_specs=in_specs,
            out_specs=out_specs,
        ),
        compiler_params=pltpu.CompilerParams(
            dimension_semantics=("parallel",)),
    )(x_t,
      w("w1"), b("b1", H), w("w2"), b("b2", H),
      w("w3"), b("b3", H), w("w4"), b("b4", H),
      w("w5"), b("b5", H), w("w7"), b("b7", D_out))

    return y_t.T                                          # back to [N, D_out]


def trunk_net_ref(x, params, scale):
    """Pure-JAX reference (mirrors the PyTorch forward, row-major)."""
    s = jnp.reshape(jnp.asarray(scale, jnp.float32), ())
    lin = lambda h, w, b: s * (h @ w.T + b)
    h = jnp.tanh(lin(x, params["w1"], params["b1"]))
    h = jnp.tanh(lin(h, params["w2"], params["b2"]))
    h = jnp.tanh(lin(h, params["w3"], params["b3"]))
    h = jnp.tanh(lin(h, params["w4"], params["b4"]))
    h = jnp.tanh(lin(h, params["w5"], params["b5"]))
    h = jnp.tanh(lin(h, params["w5"], params["b5"]))
    return lin(h, params["w7"], params["b7"])


if __name__ == "__main__":
    # Shapes consistent with a DeepONet trunk: 2-D coordinates -> basis.
    D_in, H, D_out = 2, 32, 16

    key = jax.random.PRNGKey(0)
    ks = jax.random.split(key, 16)

    def init_w(k, fan_out, fan_in, std):
        return (std * jax.random.normal(k, (fan_out, fan_in))).astype(jnp.float32)

    def init_b(k, fan_out, std=1.0):
        return (std * jax.random.normal(k, (fan_out,))).astype(jnp.float32)

    params = {
        "w1": init_w(ks[0], H, D_in, np.sqrt(2.0 / (D_in + H))),
        "b1": init_b(ks[1], H),
        "w2": init_w(ks[2], H, H, np.sqrt(2.0 / (H + H))),
        "b2": init_b(ks[3], H),
        "w3": init_w(ks[4], H, H, np.sqrt(2.0 / (H + H))),
        "b3": init_b(ks[5], H),
        "w4": init_w(ks[6], H, H, np.sqrt(2.0 / (H + D_out))),
        "b4": init_b(ks[7], H),
        "w5": init_w(ks[8], H, H, np.sqrt(2.0 / (H + H))),
        "b5": init_b(ks[9], H),
        "w7": init_w(ks[10], D_out, H, np.sqrt(2.0 / (H + D_out))),
        "b7": init_b(ks[11], D_out),
    }

    a1 = jnp.float32(0.2)
    n = jnp.float32(1.0) / a1            # self.n = 1 / self.a1.data
    scale = jnp.array([n * a1], dtype=jnp.float32)

    # Small case (single grid step, block == full dims) and a tiled case
    # (tile_n=512, grid=2: exercises the lane-tiled path and both v7x TCs).
    for N in (16, 1024):
        x = jax.random.normal(ks[12], (N, D_in), dtype=jnp.float32)
        y = trunk_net(x, params, scale)
        jax.block_until_ready(y)
        y_ref = trunk_net_ref(x, params, scale)
        np.testing.assert_allclose(np.asarray(y), np.asarray(y_ref),
                                   rtol=2e-5, atol=2e-5)

    print("KERNEL_OK")
</pallas_src>

<mosaic_0001>
module attributes {stable_mosaic.version = 11 : i64} {
  func.func @trunk_kernel(%arg0: i32, %arg1: memref<2x16xf32, #tpu.memory_space<vmem>>, %arg2: memref<32x2xf32, #tpu.memory_space<vmem>>, %arg3: memref<32x1xf32, #tpu.memory_space<vmem>>, %arg4: memref<32x32xf32, #tpu.memory_space<vmem>>, %arg5: memref<32x1xf32, #tpu.memory_space<vmem>>, %arg6: memref<32x32xf32, #tpu.memory_space<vmem>>, %arg7: memref<32x1xf32, #tpu.memory_space<vmem>>, %arg8: memref<32x32xf32, #tpu.memory_space<vmem>>, %arg9: memref<32x1xf32, #tpu.memory_space<vmem>>, %arg10: memref<32x32xf32, #tpu.memory_space<vmem>>, %arg11: memref<32x1xf32, #tpu.memory_space<vmem>>, %arg12: memref<16x32xf32, #tpu.memory_space<vmem>>, %arg13: memref<16x1xf32, #tpu.memory_space<vmem>>, %arg14: memref<16x16xf32, #tpu.memory_space<vmem>>) attributes {dimension_semantics = [#tpu.dimension_semantics<parallel>], iteration_bounds = array<i64: 1>, scalar_prefetch = 0 : i64, scratch_operands = 0 : i64, tpu.core_type = #tpu.core_type<tc>, window_params = [{transform_indices = @transform_0, window_bounds = array<i64: 2, 16>}, {pipeline_mode = #tpu.pipeline_mode<synchronous>, transform_indices = @transform_1, window_bounds = array<i64: 32, 2>}, {pipeline_mode = #tpu.pipeline_mode<synchronous>, transform_indices = @transform_2, window_bounds = array<i64: 32, 1>}, {pipeline_mode = #tpu.pipeline_mode<synchronous>, transform_indices = @transform_3, window_bounds = array<i64: 32, 32>}, {pipeline_mode = #tpu.pipeline_mode<synchronous>, transform_indices = @transform_4, window_bounds = array<i64: 32, 1>}, {pipeline_mode = #tpu.pipeline_mode<synchronous>, transform_indices = @transform_5, window_bounds = array<i64: 32, 32>}, {pipeline_mode = #tpu.pipeline_mode<synchronous>, transform_indices = @transform_6, window_bounds = array<i64: 32, 1>}, {pipeline_mode = #tpu.pipeline_mode<synchronous>, transform_indices = @transform_7, window_bounds = array<i64: 32, 32>}, {pipeline_mode = #tpu.pipeline_mode<synchronous>, transform_indices = @transform_8, window_bounds = array<i64: 32, 1>}, {pipeline_mode = #tpu.pipeline_mode<synchronous>, transform_indices = @transform_9, window_bounds = array<i64: 32, 32>}, {pipeline_mode = #tpu.pipeline_mode<synchronous>, transform_indices = @transform_10, window_bounds = array<i64: 32, 1>}, {pipeline_mode = #tpu.pipeline_mode<synchronous>, transform_indices = @transform_11, window_bounds = array<i64: 16, 32>}, {pipeline_mode = #tpu.pipeline_mode<synchronous>, transform_indices = @transform_12, window_bounds = array<i64: 16, 1>}, {transform_indices = @transform_13, window_bounds = array<i64: 16, 16>}]} {
    %c0 = arith.constant 0 : index
    %c0_0 = arith.constant 0 : index
    %0 = vector.load %arg1[%c0, %c0_0] : memref<2x16xf32, #tpu.memory_space<vmem>>, vector<2x16xf32>
    %c0_1 = arith.constant 0 : index
    %c0_2 = arith.constant 0 : index
    %1 = vector.load %arg2[%c0_1, %c0_2] : memref<32x2xf32, #tpu.memory_space<vmem>>, vector<32x2xf32>
    %c0_3 = arith.constant 0 : index
    %c0_4 = arith.constant 0 : index
    %2 = vector.load %arg3[%c0_3, %c0_4] : memref<32x1xf32, #tpu.memory_space<vmem>>, vector<32x1xf32>
    %3 = vector.extract_strided_slice %1 {offsets = [0, 0], sizes = [32, 1], strides = [1, 1]} : vector<32x2xf32> to vector<32x1xf32>
    %4 = vector.extract_strided_slice %0 {offsets = [0, 0], sizes = [1, 16], strides = [1, 1]} : vector<2x16xf32> to vector<1x16xf32>
    %5 = vector.broadcast %3 : vector<32x1xf32> to vector<32x16xf32>
    %6 = vector.broadcast %4 : vector<1x16xf32> to vector<32x16xf32>
    %7 = arith.mulf %5, %6 : vector<32x16xf32>
    %8 = vector.broadcast %2 : vector<32x1xf32> to vector<32x16xf32>
    %9 = arith.addf %8, %7 : vector<32x16xf32>
    %10 = vector.extract_strided_slice %1 {offsets = [0, 1], sizes = [32, 1], strides = [1, 1]} : vector<32x2xf32> to vector<32x1xf32>
    %11 = vector.extract_strided_slice %0 {offsets = [1, 0], sizes = [1, 16], strides = [1, 1]} : vector<2x16xf32> to vector<1x16xf32>
    %12 = vector.broadcast %10 : vector<32x1xf32> to vector<32x16xf32>
    %13 = vector.broadcast %11 : vector<1x16xf32> to vector<32x16xf32>
    %14 = arith.mulf %12, %13 : vector<32x16xf32>
    %15 = arith.addf %9, %14 : vector<32x16xf32>
    %16 = math.tanh %15 : vector<32x16xf32>
    %c0_5 = arith.constant 0 : index
    %c0_6 = arith.constant 0 : index
    %17 = vector.load %arg4[%c0_5, %c0_6] : memref<32x32xf32, #tpu.memory_space<vmem>>, vector<32x32xf32>
    %cst = arith.constant dense<0.000000e+00> : vector<32x16xf32>
    %18 = tpu.matmul %17, %16, %cst {dimension_numbers = #tpu.dot_dimension_numbers<[1], [0], [0], [1], [0, 0, 1, 1], [], []>} : vector<32x32xf32>, vector<32x16xf32>, vector<32x16xf32> -> vector<32x16xf32>
    %c0_7 = arith.constant 0 : index
    %c0_8 = arith.constant 0 : index
    %19 = vector.load %arg5[%c0_7, %c0_8] : memref<32x1xf32, #tpu.memory_space<vmem>>, vector<32x1xf32>
    %20 = vector.broadcast %19 : vector<32x1xf32> to vector<32x16xf32>
    %21 = arith.addf %18, %20 : vector<32x16xf32>
    %22 = math.tanh %21 : vector<32x16xf32>
    %c0_9 = arith.constant 0 : index
    %c0_10 = arith.constant 0 : index
    %23 = vector.load %arg6[%c0_9, %c0_10] : memref<32x32xf32, #tpu.memory_space<vmem>>, vector<32x32xf32>
    %cst_11 = arith.constant dense<0.000000e+00> : vector<32x16xf32>
    %24 = tpu.matmul %23, %22, %cst_11 {dimension_numbers = #tpu.dot_dimension_numbers<[1], [0], [0], [1], [0, 0, 1, 1], [], []>} : vector<32x32xf32>, vector<32x16xf32>, vector<32x16xf32> -> vector<32x16xf32>
    %c0_12 = arith.constant 0 : index
    %c0_13 = arith.constant 0 : index
    %25 = vector.load %arg7[%c0_12, %c0_13] : memref<32x1xf32, #tpu.memory_space<vmem>>, vector<32x1xf32>
    %26 = vector.broadcast %25 : vector<32x1xf32> to vector<32x16xf32>
    %27 = arith.addf %24, %26 : vector<32x16xf32>
    %28 = math.tanh %27 : vector<32x16xf32>
    %c0_14 = arith.constant 0 : index
    %c0_15 = arith.constant 0 : index
    %29 = vector.load %arg8[%c0_14, %c0_15] : memref<32x32xf32, #tpu.memory_space<vmem>>, vector<32x32xf32>
    %cst_16 = arith.constant dense<0.000000e+00> : vector<32x16xf32>
    %30 = tpu.matmul %29, %28, %cst_16 {dimension_numbers = #tpu.dot_dimension_numbers<[1], [0], [0], [1], [0, 0, 1, 1], [], []>} : vector<32x32xf32>, vector<32x16xf32>, vector<32x16xf32> -> vector<32x16xf32>
    %c0_17 = arith.constant 0 : index
    %c0_18 = arith.constant 0 : index
    %31 = vector.load %arg9[%c0_17, %c0_18] : memref<32x1xf32, #tpu.memory_space<vmem>>, vector<32x1xf32>
    %32 = vector.broadcast %31 : vector<32x1xf32> to vector<32x16xf32>
    %33 = arith.addf %30, %32 : vector<32x16xf32>
    %34 = math.tanh %33 : vector<32x16xf32>
    %c0_19 = arith.constant 0 : index
    %c0_20 = arith.constant 0 : index
    %35 = vector.load %arg10[%c0_19, %c0_20] : memref<32x32xf32, #tpu.memory_space<vmem>>, vector<32x32xf32>
    %cst_21 = arith.constant dense<0.000000e+00> : vector<32x16xf32>
    %36 = tpu.matmul %35, %34, %cst_21 {dimension_numbers = #tpu.dot_dimension_numbers<[1], [0], [0], [1], [0, 0, 1, 1], [], []>} : vector<32x32xf32>, vector<32x16xf32>, vector<32x16xf32> -> vector<32x16xf32>
    %c0_22 = arith.constant 0 : index
    %c0_23 = arith.constant 0 : index
    %37 = vector.load %arg11[%c0_22, %c0_23] : memref<32x1xf32, #tpu.memory_space<vmem>>, vector<32x1xf32>
    %38 = vector.broadcast %37 : vector<32x1xf32> to vector<32x16xf32>
    %39 = arith.addf %36, %38 : vector<32x16xf32>
    %40 = math.tanh %39 : vector<32x16xf32>
    %c0_24 = arith.constant 0 : index
    %c0_25 = arith.constant 0 : index
    %41 = vector.load %arg10[%c0_24, %c0_25] : memref<32x32xf32, #tpu.memory_space<vmem>>, vector<32x32xf32>
    %cst_26 = arith.constant dense<0.000000e+00> : vector<32x16xf32>
    %42 = tpu.matmul %41, %40, %cst_26 {dimension_numbers = #tpu.dot_dimension_numbers<[1], [0], [0], [1], [0, 0, 1, 1], [], []>} : vector<32x32xf32>, vector<32x16xf32>, vector<32x16xf32> -> vector<32x16xf32>
    %c0_27 = arith.constant 0 : index
    %c0_28 = arith.constant 0 : index
    %43 = vector.load %arg11[%c0_27, %c0_28] : memref<32x1xf32, #tpu.memory_space<vmem>>, vector<32x1xf32>
    %44 = vector.broadcast %43 : vector<32x1xf32> to vector<32x16xf32>
    %45 = arith.addf %42, %44 : vector<32x16xf32>
    %46 = math.tanh %45 : vector<32x16xf32>
    %c0_29 = arith.constant 0 : index
    %c0_30 = arith.constant 0 : index
    %47 = vector.load %arg12[%c0_29, %c0_30] : memref<16x32xf32, #tpu.memory_space<vmem>>, vector<16x32xf32>
    %cst_31 = arith.constant dense<0.000000e+00> : vector<16x16xf32>
    %48 = tpu.matmul %47, %46, %cst_31 {dimension_numbers = #tpu.dot_dimension_numbers<[1], [0], [0], [1], [0, 0, 1, 1], [], []>} : vector<16x32xf32>, vector<32x16xf32>, vector<16x16xf32> -> vector<16x16xf32>
    %c0_32 = arith.constant 0 : index
    %c0_33 = arith.constant 0 : index
    %49 = vector.load %arg13[%c0_32, %c0_33] : memref<16x1xf32, #tpu.memory_space<vmem>>, vector<16x1xf32>
    %50 = vector.broadcast %49 : vector<16x1xf32> to vector<16x16xf32>
    %51 = arith.addf %48, %50 : vector<16x16xf32>
    %c0_34 = arith.constant 0 : index
    %c0_35 = arith.constant 0 : index
    %52 = vector.load %arg14[%c0_34, %c0_35] : memref<16x16xf32, #tpu.memory_space<vmem>>, vector<16x16xf32>
    tpu.vector_store %arg14[%c0_34, %c0_35], %51 {strides = array<i32>} : memref<16x16xf32, #tpu.memory_space<vmem>>, vector<16x16xf32>,
    return
  }
  func.func @transform_0(%arg0: i32) -> (i32, i32) {
    %c0_i32 = arith.constant 0 : i32
    %c0_i32_0 = arith.constant 0 : i32
    return %c0_i32, %arg0 : i32, i32
  }
  func.func @transform_1(%arg0: i32) -> (i32, i32) {
    %c0_i32 = arith.constant 0 : i32
    %c0_i32_0 = arith.constant 0 : i32
    %c0_i32_1 = arith.constant 0 : i32
    return %c0_i32, %c0_i32_0 : i32, i32
  }
  func.func @transform_2(%arg0: i32) -> (i32, i32) {
    %c0_i32 = arith.constant 0 : i32
    %c0_i32_0 = arith.constant 0 : i32
    %c0_i32_1 = arith.constant 0 : i32
    return %c0_i32, %c0_i32_0 : i32, i32
  }
  func.func @transform_3(%arg0: i32) -> (i32, i32) {
    %c0_i32 = arith.constant 0 : i32
    %c0_i32_0 = arith.constant 0 : i32
    %c0_i32_1 = arith.constant 0 : i32
    return %c0_i32, %c0_i32_0 : i32, i32
  }
  func.func @transform_4(%arg0: i32) -> (i32, i32) {
    %c0_i32 = arith.constant 0 : i32
    %c0_i32_0 = arith.constant 0 : i32
    %c0_i32_1 = arith.constant 0 : i32
    return %c0_i32, %c0_i32_0 : i32, i32
  }
  func.func @transform_5(%arg0: i32) -> (i32, i32) {
    %c0_i32 = arith.constant 0 : i32
    %c0_i32_0 = arith.constant 0 : i32
    %c0_i32_1 = arith.constant 0 : i32
    return %c0_i32, %c0_i32_0 : i32, i32
  }
  func.func @transform_6(%arg0: i32) -> (i32, i32) {
    %c0_i32 = arith.constant 0 : i32
    %c0_i32_0 = arith.constant 0 : i32
    %c0_i32_1 = arith.constant 0 : i32
    return %c0_i32, %c0_i32_0 : i32, i32
  }
  func.func @transform_7(%arg0: i32) -> (i32, i32) {
    %c0_i32 = arith.constant 0 : i32
    %c0_i32_0 = arith.constant 0 : i32
    %c0_i32_1 = arith.constant 0 : i32
    return %c0_i32, %c0_i32_0 : i32, i32
  }
  func.func @transform_8(%arg0: i32) -> (i32, i32) {
    %c0_i32 = arith.constant 0 : i32
    %c0_i32_0 = arith.constant 0 : i32
    %c0_i32_1 = arith.constant 0 : i32
    return %c0_i32, %c0_i32_0 : i32, i32
  }
  func.func @transform_9(%arg0: i32) -> (i32, i32) {
    %c0_i32 = arith.constant 0 : i32
    %c0_i32_0 = arith.constant 0 : i32
    %c0_i32_1 = arith.constant 0 : i32
    return %c0_i32, %c0_i32_0 : i32, i32
  }
  func.func @transform_10(%arg0: i32) -> (i32, i32) {
    %c0_i32 = arith.constant 0 : i32
    %c0_i32_0 = arith.constant 0 : i32
    %c0_i32_1 = arith.constant 0 : i32
    return %c0_i32, %c0_i32_0 : i32, i32
  }
  func.func @transform_11(%arg0: i32) -> (i32, i32) {
    %c0_i32 = arith.constant 0 : i32
    %c0_i32_0 = arith.constant 0 : i32
    %c0_i32_1 = arith.constant 0 : i32
    return %c0_i32, %c0_i32_0 : i32, i32
  }
  func.func @transform_12(%arg0: i32) -> (i32, i32) {
    %c0_i32 = arith.constant 0 : i32
    %c0_i32_0 = arith.constant 0 : i32
    %c0_i32_1 = arith.constant 0 : i32
    return %c0_i32, %c0_i32_0 : i32, i32
  }
  func.func @transform_13(%arg0: i32) -> (i32, i32) {
    %c0_i32 = arith.constant 0 : i32
    %c0_i32_0 = arith.constant 0 : i32
    return %c0_i32, %arg0 : i32, i32
  }
}

</mosaic_0001>

<llo_original>
// kernel: tpu_custom_call.1
$region0: #{tpu_custom_call.1}
  #allocation0 [shape = 'u32[]', space=smem, size = 0x4, offset = 0x4, fixed_abs, tag = 'smem constant byte address 0x4 - core index']
  #allocation1 [shape = 'u32[144,128]{1,0:T(1,128)}', space=vmem, size = 0x12000, scoped, tag = 'internal scratch']
  %s0 = inlined_call_operand.vmem [shape: f32[2,16], index: 0, kind: input, shape index: {}]
  %s1 = inlined_call_operand.vmem [shape: f32[32,2], index: 1, kind: input, shape index: {}]
  %s2 = inlined_call_operand.vmem [shape: f32[32,1], index: 2, kind: input, shape index: {}]
  %s3 = inlined_call_operand.vmem [shape: f32[32,32], index: 3, kind: input, shape index: {}]
  %s4 = inlined_call_operand.vmem [shape: f32[32,1], index: 4, kind: input, shape index: {}]
  %s5 = inlined_call_operand.vmem [shape: f32[32,32], index: 5, kind: input, shape index: {}]
  %s6 = inlined_call_operand.vmem [shape: f32[32,1], index: 6, kind: input, shape index: {}]
  %s7 = inlined_call_operand.vmem [shape: f32[32,32], index: 7, kind: input, shape index: {}]
  %s8 = inlined_call_operand.vmem [shape: f32[32,1], index: 8, kind: input, shape index: {}]
  %s9 = inlined_call_operand.vmem [shape: f32[32,32], index: 9, kind: input, shape index: {}]
  %s10 = inlined_call_operand.vmem [shape: f32[32,1], index: 10, kind: input, shape index: {}]
  %s11 = inlined_call_operand.vmem [shape: f32[16,32], index: 11, kind: input, shape index: {}]
  %s12 = inlined_call_operand.vmem [shape: f32[16,1], index: 12, kind: input, shape index: {}]
  %s13 = inlined_call_operand.hbm [shape: f32[16,16], index: 13, kind: output, shape index: {}]
  %s14 = sld [smem:[#allocation0]]
  $region62: #{tpu_custom_call.1} parent=0
    _
  %s16 = ssub.s32 1, %s14
  %s17 = scalar_select 0, %s16, %s14
  $region1: #{tpu_custom_call.1} parent=0
    #allocation2 [shape = 'u8[8192]{0}', space=vmem, size = 0x2000, scoped, tag = 'output window, operand 0, single buffered']
    #allocation3 [shape = 's32[1]{0}', space=sflag, size = 0x4, scoped, tag = 'scoped memory for tpu_custom_call.1']
    %18 = vsyncpa [#allocation3], 0
    // Predicated region
    $region2: #{tpu_custom_call.1} parent=1 // pred_check
      _
    $region3: #{tpu_custom_call.1} parent=1 // pred_check_branch
      %20 = sbr.rel (0) target = $region5
    $region4: #{tpu_custom_call.1} parent=1 // pred_region
      _
    $region5: #{tpu_custom_call.1} parent=1 // pred_fallthru
      _
    // Predicated region
    $region6: #{tpu_custom_call.1} parent=1 // pred_check
      _
    $region7: #{tpu_custom_call.1} parent=1 // pred_check_branch
      %22 = sbr.rel (0) target = $region9
    $region8: #{tpu_custom_call.1} parent=1 // pred_region
      _
    $region9: #{tpu_custom_call.1} parent=1 // pred_fallthru
      _
    // Predicated region
    $region10: #{tpu_custom_call.1} parent=1 // pred_check
      _
    $region11: #{tpu_custom_call.1} parent=1 // pred_check_branch
      %24 = sbr.rel (0) target = $region13
    $region12: #{tpu_custom_call.1} parent=1 // pred_region
      _
    $region13: #{tpu_custom_call.1} parent=1 // pred_fallthru
      _
    // Predicated region
    $region14: #{tpu_custom_call.1} parent=1 // pred_check
      _
    $region15: #{tpu_custom_call.1} parent=1 // pred_check_branch
      %26 = sbr.rel (0) target = $region17
    $region16: #{tpu_custom_call.1} parent=1 // pred_region
      _
    $region17: #{tpu_custom_call.1} parent=1 // pred_fallthru
      _
    // Predicated region
    $region18: #{tpu_custom_call.1} parent=1 // pred_check
      _
    $region19: #{tpu_custom_call.1} parent=1 // pred_check_branch
      %28 = sbr.rel (0) target = $region21
    $region20: #{tpu_custom_call.1} parent=1 // pred_region
      _
    $region21: #{tpu_custom_call.1} parent=1 // pred_fallthru
      _
    // Predicated region
    $region22: #{tpu_custom_call.1} parent=1 // pred_check
      _
    $region23: #{tpu_custom_call.1} parent=1 // pred_check_branch
      %30 = sbr.rel (0) target = $region25
    $region24: #{tpu_custom_call.1} parent=1 // pred_region
      _
    $region25: #{tpu_custom_call.1} parent=1 // pred_fallthru
      _
    // Predicated region
    $region26: #{tpu_custom_call.1} parent=1 // pred_check
      _
    $region27: #{tpu_custom_call.1} parent=1 // pred_check_branch
      %32 = sbr.rel (0) target = $region29
    $region28: #{tpu_custom_call.1} parent=1 // pred_region
      _
    $region29: #{tpu_custom_call.1} parent=1 // pred_fallthru
      _
    // Predicated region
    $region30: #{tpu_custom_call.1} parent=1 // pred_check
      _
    $region31: #{tpu_custom_call.1} parent=1 // pred_check_branch
      %34 = sbr.rel (0) target = $region33
    $region32: #{tpu_custom_call.1} parent=1 // pred_region
      _
    $region33: #{tpu_custom_call.1} parent=1 // pred_fallthru
      _
    // Predicated region
    $region34: #{tpu_custom_call.1} parent=1 // pred_check
      _
    $region35: #{tpu_custom_call.1} parent=1 // pred_check_branch
      %36 = sbr.rel (0) target = $region37
    $region36: #{tpu_custom_call.1} parent=1 // pred_region
      _
    $region37: #{tpu_custom_call.1} parent=1 // pred_fallthru
      _
    // Predicated region
    $region38: #{tpu_custom_call.1} parent=1 // pred_check
      _
    $region39: #{tpu_custom_call.1} parent=1 // pred_check_branch
      %38 = sbr.rel (0) target = $region41
    $region40: #{tpu_custom_call.1} parent=1 // pred_region
      _
    $region41: #{tpu_custom_call.1} parent=1 // pred_fallthru
      _
    // Predicated region
    $region42: #{tpu_custom_call.1} parent=1 // pred_check
      _
    $region43: #{tpu_custom_call.1} parent=1 // pred_check_branch
      %40 = sbr.rel (0) target = $region45
    $region44: #{tpu_custom_call.1} parent=1 // pred_region
      _
    $region45: #{tpu_custom_call.1} parent=1 // pred_fallthru
      _
    // Predicated region
    $region46: #{tpu_custom_call.1} parent=1 // pred_check
      _
    $region47: #{tpu_custom_call.1} parent=1 // pred_check_branch
      %42 = sbr.rel (0) target = $region49
    $region48: #{tpu_custom_call.1} parent=1 // pred_region
      _
    $region49: #{tpu_custom_call.1} parent=1 // pred_fallthru
      _
    // Predicated region
    $region50: #{tpu_custom_call.1} parent=1 // pred_check
      _
    $region51: #{tpu_custom_call.1} parent=1 // pred_check_branch
      %44 = sbr.rel (0) target = $region53
    $region52: #{tpu_custom_call.1} parent=1 // pred_region
      _
    $region53: #{tpu_custom_call.1} parent=1 // pred_fallthru
      _
    %v45 = vld [vmem:[%s0] sm:$0x3]
    %v46 = vld [vmem:[%s1] sm:$0xff]
    %v47 = vld [vmem:[%s1 + $0x8] sm:$0xff]
    %v48 = vld [vmem:[%s1 + $0x10] sm:$0xff]
    %v49 = vld [vmem:[%s1 + $0x18] sm:$0xff]
    %v50 = vld [vmem:[%s2] sm:$0xff]
    %v51 = vld [vmem:[%s2 + $0x8] sm:$0xff]
    %v52 = vld [vmem:[%s2 + $0x10] sm:$0xff]
    %v53 = vld [vmem:[%s2 + $0x18] sm:$0xff]
    %55 = vset.pattern.permute.xlu0 0
    %56 = vperm.xlu0 %55, %v46
    %v57 = vpop.permute.xlu0 %56
    %60 = vset.pattern.permute.xlu0 0
    %61 = vperm.xlu0 %60, %v47
    %v62 = vpop.permute.xlu0 %61
    %65 = vset.pattern.permute.xlu0 0
    %66 = vperm.xlu0 %65, %v48
    %v67 = vpop.permute.xlu0 %66
    %70 = vset.pattern.permute.xlu0 0
    %71 = vperm.xlu0 %70, %v49
    %v72 = vpop.permute.xlu0 %71
    %v74 = vlaneseq
    %v75 = vshrl.u32 %v74, 7
    %v76 = vsub.s32 0, %v75
    %v77 = vrot.slane %v45, %v76
    %v78 = vmul.f32 %v57, %v77
    %v79 = vmul.f32 %v62, %v77
    %v80 = vmul.f32 %v67, %v77
    %v81 = vmul.f32 %v72, %v77
    %83 = vset.pattern.permute.xlu0 0
    %84 = vperm.xlu0 %83, %v50
    %v85 = vpop.permute.xlu0 %84
    %88 = vset.pattern.permute.xlu0 0
    %89 = vperm.xlu0 %88, %v51
    %v90 = vpop.permute.xlu0 %89
    %93 = vset.pattern.permute.xlu0 0
    %94 = vperm.xlu0 %93, %v52
    %v95 = vpop.permute.xlu0 %94
    %98 = vset.pattern.permute.xlu0 0
    %99 = vperm.xlu0 %98, %v53
    %v100 = vpop.permute.xlu0 %99
    %v102 = vadd.f32 %v85, %v78
    %v103 = vadd.f32 %v90, %v79
    %v104 = vadd.f32 %v95, %v80
    %v105 = vadd.f32 %v100, %v81
    %106 = vset.pattern.permute.xlu0 1
    %107 = vperm.xlu0 %106, %v46
    %v108 = vpop.permute.xlu0 %107
    %110 = vset.pattern.permute.xlu0 1
    %111 = vperm.xlu0 %110, %v47
    %v112 = vpop.permute.xlu0 %111
    %114 = vset.pattern.permute.xlu0 1
    %115 = vperm.xlu0 %114, %v48
    %v116 = vpop.permute.xlu0 %115
    %118 = vset.pattern.permute.xlu0 1
    %119 = vperm.xlu0 %118, %v49
    %v120 = vpop.permute.xlu0 %119
    %v122 = vlaneseq
    %v123 = vshrl.u32 %v122, 7
    %v124 = vsub.s32 1, %v123
    %v125 = vrot.slane %v45, %v124
    %v126 = vmul.f32 %v108, %v125
    %v127 = vmul.f32 %v112, %v125
    %v128 = vmul.f32 %v116, %v125
    %v129 = vmul.f32 %v120, %v125
    %v130 = vadd.f32 %v102, %v126
    %v131 = vadd.f32 %v103, %v127
    %v132 = vadd.f32 %v104, %v128
    %v133 = vadd.f32 %v105, %v129
    %v134 = vtanh.pop %v130
    %v135 = vtanh.pop %v131
    %v136 = vtanh.pop %v132
    %v137 = vtanh.pop %v133
    %v138 = vld [vmem:[%s3] sm:$0xff]
    %v139 = vld [vmem:[%s3 + $0x8] sm:$0xff]
    %v140 = vld [vmem:[%s3 + $0x10] sm:$0xff]
    %v141 = vld [vmem:[%s3 + $0x18] sm:$0xff]
    %v142 = vld [vmem:[%s4] sm:$0xff]
    %v143 = vld [vmem:[%s4 + $0x8] sm:$0xff]
    %v144 = vld [vmem:[%s4 + $0x10] sm:$0xff]
    %v145 = vld [vmem:[%s4 + $0x18] sm:$0xff]
    %147 = vset.pattern.permute.xlu0 0
    %148 = vperm.xlu0 %147, %v142
    %v149 = vpop.permute.xlu0 %148
    %152 = vset.pattern.permute.xlu0 0
    %153 = vperm.xlu0 %152, %v143
    %v154 = vpop.permute.xlu0 %153
    %157 = vset.pattern.permute.xlu0 0
    %158 = vperm.xlu0 %157, %v144
    %v159 = vpop.permute.xlu0 %158
    %162 = vset.pattern.permute.xlu0 0
    %163 = vperm.xlu0 %162, %v145
    %v164 = vpop.permute.xlu0 %163
    %vm166 = vcmask 261120
    %v168 = vsel %vm166, %v138, 0
    %v171 = vsel %vm166, %v139, 0
    %v174 = vsel %vm166, %v140, 0
    %v177 = vsel %vm166, %v141, 0
    %179 = vmatprep.subr.mxu0 0.0
    %180 = vmatpush1.msra.mxu0 %v134
    %181 = vmatprep.subr.mxu0 0.0
    %182 = vmatpush1.msra.mxu0 %v135
    %183 = vmatprep.subr.mxu0 0.0
    %184 = vmatpush1.msra.mxu0 %v136
    %185 = vmatprep.subr.mxu0 0.0
    %186 = vmatpush1.msra.mxu0 %v137
    %187 = vmatprep.subr.mxu0 0.0
    %188 = vmatpush1.msra.mxu0 0.0
    %189 = vmatprep.subr.mxu0 0.0
    %190 = vmatpush1.msra.mxu0 0.0
    %191 = vmatprep.subr.mxu0 0.0
    %192 = vmatpush1.msra.mxu0 0.0
    %193 = vmatprep.subr.mxu0 0.0
    %194 = vmatpush1.msra.mxu0 0.0
    %195 = vmatprep.subr.mxu0 0.0
    %196 = vmatpush1.msra.mxu0 0.0
    %197 = vmatprep.subr.mxu0 0.0
    %198 = vmatpush1.msra.mxu0 0.0
    %199 = vmatprep.subr.mxu0 0.0
    %200 = vmatpush1.msra.mxu0 0.0
    %201 = vmatprep.subr.mxu0 0.0
    %202 = vmatpush1.msra.mxu0 0.0
    %203 = vmatprep.subr.mxu0 0.0
    %204 = vmatpush1.msra.mxu0 0.0
    %205 = vmatprep.subr.mxu0 0.0
    %206 = vmatpush1.msra.mxu0 0.0
    %207 = vmatprep.subr.mxu0 0.0
    %208 = vmatpush1.msra.mxu0 0.0
    %209 = vmatprep.subr.mxu0 0.0
    %210 = vmatpush1.msra.mxu0 0.0
    %211 = vmatprep.subr.mxu0 0.0
    %212 = vmatpush1.msra.mxu0 0.0
    %213 = vmatprep.subr.mxu0 0.0
    %214 = vmatpush1.msra.mxu0 0.0
    %215 = vmatprep.subr.mxu0 0.0
    %216 = vmatpush1.msra.mxu0 0.0
    %217 = vmatprep.subr.mxu0 0.0
    %218 = vmatpush1.msra.mxu0 0.0
    %219 = vmatprep.subr.mxu0 0.0
    %220 = vmatpush1.msra.mxu0 0.0
    %221 = vmatprep.subr.mxu0 0.0
    %222 = vmatpush1.msra.mxu0 0.0
    %223 = vmatprep.subr.mxu0 0.0
    %224 = vmatpush1.msra.mxu0 0.0
    %225 = vmatprep.subr.mxu0 0.0
    %226 = vmatpush1.msra.mxu0 0.0
    %227 = vmatprep.subr.mxu0 0.0
    %228 = vmatpush1.msra.mxu0 0.0
    %229 = vmatprep.subr.mxu0 0.0
    %230 = vmatpush1.msra.mxu0 0.0
    %231 = vmatprep.subr.mxu0 0.0
    %232 = vmatpush1.msra.mxu0 0.0
    %233 = vmatprep.subr.mxu0 0.0
    %234 = vmatpush1.msra.mxu0 0.0
    %235 = vmatprep.subr.mxu0 0.0
    %236 = vmatpush1.msra.mxu0 0.0
    %237 = vmatprep.subr.mxu0 0.0
    %238 = vmatpush1.msra.mxu0 0.0
    %239 = vmatprep.subr.mxu0 0.0
    %240 = vmatpush1.msra.mxu0 0.0
    %241 = vmatprep.subr.mxu0 0.0
    %242 = vmatpush1.msra.mxu0 0.0
    %243 = vmatprep.mubr.f32.mxu0 0.0
    %244 = vmatmul.mubr.f32.gmra.mrb[0].mxu0 %v168
    %v245 = vpop.f32.mrb[0].mxu0
    %v246 = vadd.f32 %v149, %v245
    %v247 = vpop.f32.mrb[0].mxu0
    %248 = vmatprep.mubr.f32.mxu0 0.0
    %249 = vmatmul.mubr.f32.gmra.mrb[0].mxu0 %v171
    %v250 = vpop.f32.mrb[0].mxu0
    %v251 = vadd.f32 %v154, %v250
    %v252 = vpop.f32.mrb[0].mxu0
    %253 = vmatprep.mubr.f32.mxu0 0.0
    %254 = vmatmul.mubr.f32.gmra.mrb[0].mxu0 %v174
    %v255 = vpop.f32.mrb[0].mxu0
    %v256 = vadd.f32 %v159, %v255
    %v257 = vpop.f32.mrb[0].mxu0
    %258 = vmatprep.mubr.f32.mxu0 0.0
    %259 = vmatmul.mubr.f32.gmra.mrb[0].mxu0 %v177
    %v260 = vpop.f32.mrb[0].mxu0
    %v261 = vadd.f32 %v164, %v260
    %v262 = vpop.f32.mrb[0].mxu0
    %263 = vdwg.mxu0
    %v264 = vtanh.pop %v246
    %v265 = vtanh.pop %v251
    %v266 = vtanh.pop %v256
    %v267 = vtanh.pop %v261
    %v268 = vld [vmem:[%s5] sm:$0xff]
    %v269 = vld [vmem:[%s5 + $0x8] sm:$0xff]
    %v270 = vld [vmem:[%s5 + $0x10] sm:$0xff]
    %v271 = vld [vmem:[%s5 + $0x18] sm:$0xff]
    %v272 = vld [vmem:[%s6] sm:$0xff]
    %v273 = vld [vmem:[%s6 + $0x8] sm:$0xff]
    %v274 = vld [vmem:[%s6 + $0x10] sm:$0xff]
    %v275 = vld [vmem:[%s6 + $0x18] sm:$0xff]
    %277 = vset.pattern.permute.xlu0 0
    %278 = vperm.xlu0 %277, %v272
    %v279 = vpop.permute.xlu0 %278
    %282 = vset.pattern.permute.xlu0 0
    %283 = vperm.xlu0 %282, %v273
    %v284 = vpop.permute.xlu0 %283
    %287 = vset.pattern.permute.xlu0 0
    %288 = vperm.xlu0 %287, %v274
    %v289 = vpop.permute.xlu0 %288
    %292 = vset.pattern.permute.xlu0 0
    %293 = vperm.xlu0 %292, %v275
    %v294 = vpop.permute.xlu0 %293
    %v297 = vsel %vm166, %v268, 0
    %v300 = vsel %vm166, %v269, 0
    %v303 = vsel %vm166, %v270, 0
    %v306 = vsel %vm166, %v271, 0
    %308 = vmatprep.subr.mxu0 0.0
    %309 = vmatpush1.msra.mxu0 %v264
    %310 = vmatprep.subr.mxu0 0.0
    %311 = vmatpush1.msra.mxu0 %v265
    %312 = vmatprep.subr.mxu0 0.0
    %313 = vmatpush1.msra.mxu0 %v266
    %314 = vmatprep.subr.mxu0 0.0
    %315 = vmatpush1.msra.mxu0 %v267
    %316 = vmatprep.subr.mxu0 0.0
    %317 = vmatpush1.msra.mxu0 0.0
    %318 = vmatprep.subr.mxu0 0.0
    %319 = vmatpush1.msra.mxu0 0.0
    %320 = vmatprep.subr.mxu0 0.0
    %321 = vmatpush1.msra.mxu0 0.0
    %322 = vmatprep.subr.mxu0 0.0
    %323 = vmatpush1.msra.mxu0 0.0
    %324 = vmatprep.subr.mxu0 0.0
    %325 = vmatpush1.msra.mxu0 0.0
    %326 = vmatprep.subr.mxu0 0.0
    %327 = vmatpush1.msra.mxu0 0.0
    %328 = vmatprep.subr.mxu0 0.0
    %329 = vmatpush1.msra.mxu0 0.0
    %330 = vmatprep.subr.mxu0 0.0
    %331 = vmatpush1.msra.mxu0 0.0
    %332 = vmatprep.subr.mxu0 0.0
    %333 = vmatpush1.msra.mxu0 0.0
    %334 = vmatprep.subr.mxu0 0.0
    %335 = vmatpush1.msra.mxu0 0.0
    %336 = vmatprep.subr.mxu0 0.0
    %337 = vmatpush1.msra.mxu0 0.0
    %338 = vmatprep.subr.mxu0 0.0
    %339 = vmatpush1.msra.mxu0 0.0
    %340 = vmatprep.subr.mxu0 0.0
    %341 = vmatpush1.msra.mxu0 0.0
    %342 = vmatprep.subr.mxu0 0.0
    %343 = vmatpush1.msra.mxu0 0.0
    %344 = vmatprep.subr.mxu0 0.0
    %345 = vmatpush1.msra.mxu0 0.0
    %346 = vmatprep.subr.mxu0 0.0
    %347 = vmatpush1.msra.mxu0 0.0
    %348 = vmatprep.subr.mxu0 0.0
    %349 = vmatpush1.msra.mxu0 0.0
    %350 = vmatprep.subr.mxu0 0.0
    %351 = vmatpush1.msra.mxu0 0.0
    %352 = vmatprep.subr.mxu0 0.0
    %353 = vmatpush1.msra.mxu0 0.0
    %354 = vmatprep.subr.mxu0 0.0
    %355 = vmatpush1.msra.mxu0 0.0
    %356 = vmatprep.subr.mxu0 0.0
    %357 = vmatpush1.msra.mxu0 0.0
    %358 = vmatprep.subr.mxu0 0.0
    %359 = vmatpush1.msra.mxu0 0.0
    %360 = vmatprep.subr.mxu0 0.0
    %361 = vmatpush1.msra.mxu0 0.0
    %362 = vmatprep.subr.mxu0 0.0
    %363 = vmatpush1.msra.mxu0 0.0
    %364 = vmatprep.subr.mxu0 0.0
    %365 = vmatpush1.msra.mxu0 0.0
    %366 = vmatprep.subr.mxu0 0.0
    %367 = vmatpush1.msra.mxu0 0.0
    %368 = vmatprep.subr.mxu0 0.0
    %369 = vmatpush1.msra.mxu0 0.0
    %370 = vmatprep.subr.mxu0 0.0
    %371 = vmatpush1.msra.mxu0 0.0
    %372 = vmatprep.mubr.f32.mxu0 0.0
    %373 = vmatmul.mubr.f32.gmra.mrb[0].mxu0 %v297
    %v374 = vpop.f32.mrb[0].mxu0
    %v375 = vadd.f32 %v279, %v374
    %v376 = vpop.f32.mrb[0].mxu0
    %377 = vmatprep.mubr.f32.mxu0 0.0
    %378 = vmatmul.mubr.f32.gmra.mrb[0].mxu0 %v300
    %v379 = vpop.f32.mrb[0].mxu0
    %v380 = vadd.f32 %v284, %v379
    %v381 = vpop.f32.mrb[0].mxu0
    %382 = vmatprep.mubr.f32.mxu0 0.0
    %383 = vmatmul.mubr.f32.gmra.mrb[0].mxu0 %v303
    %v384 = vpop.f32.mrb[0].mxu0
    %v385 = vadd.f32 %v289, %v384
    %v386 = vpop.f32.mrb[0].mxu0
    %387 = vmatprep.mubr.f32.mxu0 0.0
    %388 = vmatmul.mubr.f32.gmra.mrb[0].mxu0 %v306
    %v389 = vpop.f32.mrb[0].mxu0
    %v390 = vadd.f32 %v294, %v389
    %v391 = vpop.f32.mrb[0].mxu0
    %392 = vdwg.mxu0
    %v393 = vtanh.pop %v375
    %v394 = vtanh.pop %v380
    %v395 = vtanh.pop %v385
    %v396 = vtanh.pop %v390
    %v397 = vld [vmem:[%s7] sm:$0xff]
    %v398 = vld [vmem:[%s7 + $0x8] sm:$0xff]
    %v399 = vld [vmem:[%s7 + $0x10] sm:$0xff]
    %v400 = vld [vmem:[%s7 + $0x18] sm:$0xff]
    %v401 = vld [vmem:[%s8] sm:$0xff]
    %v402 = vld [vmem:[%s8 + $0x8] sm:$0xff]
    %v403 = vld [vmem:[%s8 + $0x10] sm:$0xff]
    %v404 = vld [vmem:[%s8 + $0x18] sm:$0xff]
    %406 = vset.pattern.permute.xlu0 0
    %407 = vperm.xlu0 %406, %v401
    %v408 = vpop.permute.xlu0 %407
    %411 = vset.pattern.permute.xlu0 0
    %412 = vperm.xlu0 %411, %v402
    %v413 = vpop.permute.xlu0 %412
    %416 = vset.pattern.permute.xlu0 0
    %417 = vperm.xlu0 %416, %v403
    %v418 = vpop.permute.xlu0 %417
    %421 = vset.pattern.permute.xlu0 0
    %422 = vperm.xlu0 %421, %v404
    %v423 = vpop.permute.xlu0 %422
    %v426 = vsel %vm166, %v397, 0
    %v429 = vsel %vm166, %v398, 0
    %v432 = vsel %vm166, %v399, 0
    %v435 = vsel %vm166, %v400, 0
    %437 = vmatprep.subr.mxu0 0.0
    %438 = vmatpush1.msra.mxu0 %v393
    %439 = vmatprep.subr.mxu0 0.0
    %440 = vmatpush1.msra.mxu0 %v394
    %441 = vmatprep.subr.mxu0 0.0
    %442 = vmatpush1.msra.mxu0 %v395
    %443 = vmatprep.subr.mxu0 0.0
    %444 = vmatpush1.msra.mxu0 %v396
    %445 = vmatprep.subr.mxu0 0.0
    %446 = vmatpush1.msra.mxu0 0.0
    %447 = vmatprep.subr.mxu0 0.0
    %448 = vmatpush1.msra.mxu0 0.0
    %449 = vmatprep.subr.mxu0 0.0
    %450 = vmatpush1.msra.mxu0 0.0
    %451 = vmatprep.subr.mxu0 0.0
    %452 = vmatpush1.msra.mxu0 0.0
    %453 = vmatprep.subr.mxu0 0.0
    %454 = vmatpush1.msra.mxu0 0.0
    %455 = vmatprep.subr.mxu0 0.0
    %456 = vmatpush1.msra.mxu0 0.0
    %457 = vmatprep.subr.mxu0 0.0
    %458 = vmatpush1.msra.mxu0 0.0
    %459 = vmatprep.subr.mxu0 0.0
    %460 = vmatpush1.msra.mxu0 0.0
    %461 = vmatprep.subr.mxu0 0.0
    %462 = vmatpush1.msra.mxu0 0.0
    %463 = vmatprep.subr.mxu0 0.0
    %464 = vmatpush1.msra.mxu0 0.0
    %465 = vmatprep.subr.mxu0 0.0
    %466 = vmatpush1.msra.mxu0 0.0
    %467 = vmatprep.subr.mxu0 0.0
    %468 = vmatpush1.msra.mxu0 0.0
    %469 = vmatprep.subr.mxu0 0.0
    %470 = vmatpush1.msra.mxu0 0.0
    %471 = vmatprep.subr.mxu0 0.0
    %472 = vmatpush1.msra.mxu0 0.0
    %473 = vmatprep.subr.mxu0 0.0
    %474 = vmatpush1.msra.mxu0 0.0
    %475 = vmatprep.subr.mxu0 0.0
    %476 = vmatpush1.msra.mxu0 0.0
    %477 = vmatprep.subr.mxu0 0.0
    %478 = vmatpush1.msra.mxu0 0.0
    %479 = vmatprep.subr.mxu0 0.0
    %480 = vmatpush1.msra.mxu0 0.0
    %481 = vmatprep.subr.mxu0 0.0
    %482 = vmatpush1.msra.mxu0 0.0
    %483 = vmatprep.subr.mxu0 0.0
    %484 = vmatpush1.msra.mxu0 0.0
    %485 = vmatprep.subr.mxu0 0.0
    %486 = vmatpush1.msra.mxu0 0.0
    %487 = vmatprep.subr.mxu0 0.0
    %488 = vmatpush1.msra.mxu0 0.0
    %489 = vmatprep.subr.mxu0 0.0
    %490 = vmatpush1.msra.mxu0 0.0
    %491 = vmatprep.subr.mxu0 0.0
    %492 = vmatpush1.msra.mxu0 0.0
    %493 = vmatprep.subr.mxu0 0.0
    %494 = vmatpush1.msra.mxu0 0.0
    %495 = vmatprep.subr.mxu0 0.0
    %496 = vmatpush1.msra.mxu0 0.0
    %497 = vmatprep.subr.mxu0 0.0
    %498 = vmatpush1.msra.mxu0 0.0
    %499 = vmatprep.subr.mxu0 0.0
    %500 = vmatpush1.msra.mxu0 0.0
    %501 = vmatprep.mubr.f32.mxu0 0.0
    %502 = vmatmul.mubr.f32.gmra.mrb[0].mxu0 %v426
    %v503 = vpop.f32.mrb[0].mxu0
    %v504 = vadd.f32 %v408, %v503
    %v505 = vpop.f32.mrb[0].mxu0
    %506 = vmatprep.mubr.f32.mxu0 0.0
    %507 = vmatmul.mubr.f32.gmra.mrb[0].mxu0 %v429
    %v508 = vpop.f32.mrb[0].mxu0
    %v509 = vadd.f32 %v413, %v508
    %v510 = vpop.f32.mrb[0].mxu0
    %511 = vmatprep.mubr.f32.mxu0 0.0
    %512 = vmatmul.mubr.f32.gmra.mrb[0].mxu0 %v432
    %v513 = vpop.f32.mrb[0].mxu0
    %v514 = vadd.f32 %v418, %v513
    %v515 = vpop.f32.mrb[0].mxu0
    %516 = vmatprep.mubr.f32.mxu0 0.0
    %517 = vmatmul.mubr.f32.gmra.mrb[0].mxu0 %v435
    %v518 = vpop.f32.mrb[0].mxu0
    %v519 = vadd.f32 %v423, %v518
    %v520 = vpop.f32.mrb[0].mxu0
    %521 = vdwg.mxu0
    %v522 = vtanh.pop %v504
    %v523 = vtanh.pop %v509
    %v524 = vtanh.pop %v514
    %v525 = vtanh.pop %v519
    %v526 = vld [vmem:[%s9] sm:$0xff]
    %v527 = vld [vmem:[%s9 + $0x8] sm:$0xff]
    %v528 = vld [vmem:[%s9 + $0x10] sm:$0xff]
    %v529 = vld [vmem:[%s9 + $0x18] sm:$0xff]
    %v530 = vld [vmem:[%s10] sm:$0xff]
    %v531 = vld [vmem:[%s10 + $0x8] sm:$0xff]
    %v532 = vld [vmem:[%s10 + $0x10] sm:$0xff]
    %v533 = vld [vmem:[%s10 + $0x18] sm:$0xff]
    %535 = vset.pattern.permute.xlu0 0
    %536 = vperm.xlu0 %535, %v530
    %v537 = vpop.permute.xlu0 %536
    %540 = vset.pattern.permute.xlu0 0
    %541 = vperm.xlu0 %540, %v531
    %v542 = vpop.permute.xlu0 %541
    %545 = vset.pattern.permute.xlu0 0
    %546 = vperm.xlu0 %545, %v532
    %v547 = vpop.permute.xlu0 %546
    %550 = vset.pattern.permute.xlu0 0
    %551 = vperm.xlu0 %550, %v533
    %v552 = vpop.permute.xlu0 %551
    %v555 = vsel %vm166, %v526, 0
    %v558 = vsel %vm166, %v527, 0
    %v561 = vsel %vm166, %v528, 0
    %v564 = vsel %vm166, %v529, 0
    %566 = vmatprep.subr.mxu0 0.0
    %567 = vmatpush1.msra.mxu0 %v522
    %568 = vmatprep.subr.mxu0 0.0
    %569 = vmatpush1.msra.mxu0 %v523
    %570 = vmatprep.subr.mxu0 0.0
    %571 = vmatpush1.msra.mxu0 %v524
    %572 = vmatprep.subr.mxu0 0.0
    %573 = vmatpush1.msra.mxu0 %v525
    %574 = vmatprep.subr.mxu0 0.0
    %575 = vmatpush1.msra.mxu0 0.0
    %576 = vmatprep.subr.mxu0 0.0
    %577 = vmatpush1.msra.mxu0 0.0
    %578 = vmatprep.subr.mxu0 0.0
    %579 = vmatpush1.msra.mxu0 0.0
    %580 = vmatprep.subr.mxu0 0.0
    %581 = vmatpush1.msra.mxu0 0.0
    %582 = vmatprep.subr.mxu0 0.0
    %583 = vmatpush1.msra.mxu0 0.0
    %584 = vmatprep.subr.mxu0 0.0
    %585 = vmatpush1.msra.mxu0 0.0
    %586 = vmatprep.subr.mxu0 0.0
    %587 = vmatpush1.msra.mxu0 0.0
    %588 = vmatprep.subr.mxu0 0.0
    %589 = vmatpush1.msra.mxu0 0.0
    %590 = vmatprep.subr.mxu0 0.0
    %591 = vmatpush1.msra.mxu0 0.0
    %592 = vmatprep.subr.mxu0 0.0
    %593 = vmatpush1.msra.mxu0 0.0
    %594 = vmatprep.subr.mxu0 0.0
    %595 = vmatpush1.msra.mxu0 0.0
    %596 = vmatprep.subr.mxu0 0.0
    %597 = vmatpush1.msra.mxu0 0.0
    %598 = vmatprep.subr.mxu0 0.0
    %599 = vmatpush1.msra.mxu0 0.0
    %600 = vmatprep.subr.mxu0 0.0
    %601 = vmatpush1.msra.mxu0 0.0
    %602 = vmatprep.subr.mxu0 0.0
    %603 = vmatpush1.msra.mxu0 0.0
    %604 = vmatprep.subr.mxu0 0.0
    %605 = vmatpush1.msra.mxu0 0.0
    %606 = vmatprep.subr.mxu0 0.0
    %607 = vmatpush1.msra.mxu0 0.0
    %608 = vmatprep.subr.mxu0 0.0
    %609 = vmatpush1.msra.mxu0 0.0
    %610 = vmatprep.subr.mxu0 0.0
    %611 = vmatpush1.msra.mxu0 0.0
    %612 = vmatprep.subr.mxu0 0.0
    %613 = vmatpush1.msra.mxu0 0.0
    %614 = vmatprep.subr.mxu0 0.0
    %615 = vmatpush1.msra.mxu0 0.0
    %616 = vmatprep.subr.mxu0 0.0
    %617 = vmatpush1.msra.mxu0 0.0
    %618 = vmatprep.subr.mxu0 0.0
    %619 = vmatpush1.msra.mxu0 0.0
    %620 = vmatprep.subr.mxu0 0.0
    %621 = vmatpush1.msra.mxu0 0.0
    %622 = vmatprep.subr.mxu0 0.0
    %623 = vmatpush1.msra.mxu0 0.0
    %624 = vmatprep.subr.mxu0 0.0
    %625 = vmatpush1.msra.mxu0 0.0
    %626 = vmatprep.subr.mxu0 0.0
    %627 = vmatpush1.msra.mxu0 0.0
    %628 = vmatprep.subr.mxu0 0.0
    %629 = vmatpush1.msra.mxu0 0.0
    %630 = vmatprep.mubr.f32.mxu0 0.0
    %631 = vmatmul.mubr.f32.gmra.mrb[0].mxu0 %v555
    %v632 = vpop.f32.mrb[0].mxu0
    %v633 = vadd.f32 %v537, %v632
    %v634 = vpop.f32.mrb[0].mxu0
    %635 = vmatprep.mubr.f32.mxu0 0.0
    %636 = vmatmul.mubr.f32.gmra.mrb[0].mxu0 %v558
    %v637 = vpop.f32.mrb[0].mxu0
    %v638 = vadd.f32 %v542, %v637
    %v639 = vpop.f32.mrb[0].mxu0
    %640 = vmatprep.mubr.f32.mxu0 0.0
    %641 = vmatmul.mubr.f32.gmra.mrb[0].mxu0 %v561
    %v642 = vpop.f32.mrb[0].mxu0
    %v643 = vadd.f32 %v547, %v642
    %v644 = vpop.f32.mrb[0].mxu0
    %645 = vmatprep.mubr.f32.mxu0 0.0
    %646 = vmatmul.mubr.f32.gmra.mrb[0].mxu0 %v564
    %v647 = vpop.f32.mrb[0].mxu0
    %v648 = vadd.f32 %v552, %v647
    %v649 = vpop.f32.mrb[0].mxu0
    %650 = vdwg.mxu0
    %v651 = vtanh.pop %v633
    %v652 = vtanh.pop %v638
    %v653 = vtanh.pop %v643
    %v654 = vtanh.pop %v648
    %655 = vmatprep.subr.mxu0 0.0
    %656 = vmatpush1.msra.mxu0 %v651
    %657 = vmatprep.subr.mxu0 0.0
    %658 = vmatpush1.msra.mxu0 %v652
    %659 = vmatprep.subr.mxu0 0.0
    %660 = vmatpush1.msra.mxu0 %v653
    %661 = vmatprep.subr.mxu0 0.0
    %662 = vmatpush1.msra.mxu0 %v654
    %663 = vmatprep.subr.mxu0 0.0
    %664 = vmatpush1.msra.mxu0 0.0
    %665 = vmatprep.subr.mxu0 0.0
    %666 = vmatpush1.msra.mxu0 0.0
    %667 = vmatprep.subr.mxu0 0.0
    %668 = vmatpush1.msra.mxu0 0.0
    %669 = vmatprep.subr.mxu0 0.0
    %670 = vmatpush1.msra.mxu0 0.0
    %671 = vmatprep.subr.mxu0 0.0
    %672 = vmatpush1.msra.mxu0 0.0
    %673 = vmatprep.subr.mxu0 0.0
    %674 = vmatpush1.msra.mxu0 0.0
    %675 = vmatprep.subr.mxu0 0.0
    %676 = vmatpush1.msra.mxu0 0.0
    %677 = vmatprep.subr.mxu0 0.0
    %678 = vmatpush1.msra.mxu0 0.0
    %679 = vmatprep.subr.mxu0 0.0
    %680 = vmatpush1.msra.mxu0 0.0
    %681 = vmatprep.subr.mxu0 0.0
    %682 = vmatpush1.msra.mxu0 0.0
    %683 = vmatprep.subr.mxu0 0.0
    %684 = vmatpush1.msra.mxu0 0.0
    %685 = vmatprep.subr.mxu0 0.0
    %686 = vmatpush1.msra.mxu0 0.0
    %687 = vmatprep.subr.mxu0 0.0
    %688 = vmatpush1.msra.mxu0 0.0
    %689 = vmatprep.subr.mxu0 0.0
    %690 = vmatpush1.msra.mxu0 0.0
    %691 = vmatprep.subr.mxu0 0.0
    %692 = vmatpush1.msra.mxu0 0.0
    %693 = vmatprep.subr.mxu0 0.0
    %694 = vmatpush1.msra.mxu0 0.0
    %695 = vmatprep.subr.mxu0 0.0
    %696 = vmatpush1.msra.mxu0 0.0
    %697 = vmatprep.subr.mxu0 0.0
    %698 = vmatpush1.msra.mxu0 0.0
    %699 = vmatprep.subr.mxu0 0.0
    %700 = vmatpush1.msra.mxu0 0.0
    %701 = vmatprep.subr.mxu0 0.0
    %702 = vmatpush1.msra.mxu0 0.0
    %703 = vmatprep.subr.mxu0 0.0
    %704 = vmatpush1.msra.mxu0 0.0
    %705 = vmatprep.subr.mxu0 0.0
    %706 = vmatpush1.msra.mxu0 0.0
    %707 = vmatprep.subr.mxu0 0.0
    %708 = vmatpush1.msra.mxu0 0.0
    %709 = vmatprep.subr.mxu0 0.0
    %710 = vmatpush1.msra.mxu0 0.0
    %711 = vmatprep.subr.mxu0 0.0
    %712 = vmatpush1.msra.mxu0 0.0
    %713 = vmatprep.subr.mxu0 0.0
    %714 = vmatpush1.msra.mxu0 0.0
    %715 = vmatprep.subr.mxu0 0.0
    %716 = vmatpush1.msra.mxu0 0.0
    %717 = vmatprep.subr.mxu0 0.0
    %718 = vmatpush1.msra.mxu0 0.0
    %719 = vmatprep.mubr.f32.mxu0 0.0
    %720 = vmatmul.mubr.f32.gmra.mrb[0].mxu0 %v555
    %v721 = vpop.f32.mrb[0].mxu0
    %v722 = vadd.f32 %v537, %v721
    %v723 = vpop.f32.mrb[0].mxu0
    %724 = vmatprep.mubr.f32.mxu0 0.0
    %725 = vmatmul.mubr.f32.gmra.mrb[0].mxu0 %v558
    %v726 = vpop.f32.mrb[0].mxu0
    %v727 = vadd.f32 %v542, %v726
    %v728 = vpop.f32.mrb[0].mxu0
    %729 = vmatprep.mubr.f32.mxu0 0.0
    %730 = vmatmul.mubr.f32.gmra.mrb[0].mxu0 %v561
    %v731 = vpop.f32.mrb[0].mxu0
    %v732 = vadd.f32 %v547, %v731
    %v733 = vpop.f32.mrb[0].mxu0
    %734 = vmatprep.mubr.f32.mxu0 0.0
    %735 = vmatmul.mubr.f32.gmra.mrb[0].mxu0 %v564
    %v736 = vpop.f32.mrb[0].mxu0
    %v737 = vadd.f32 %v552, %v736
    %v738 = vpop.f32.mrb[0].mxu0
    %739 = vdwg.mxu0
    %v740 = vtanh.pop %v722
    %v741 = vtanh.pop %v727
    %v742 = vtanh.pop %v732
    %v743 = vtanh.pop %v737
    %v744 = vld [vmem:[%s11] sm:$0xff]
    %v745 = vld [vmem:[%s11 + $0x8] sm:$0xff]
    %v746 = vld [vmem:[%s12] sm:$0xff]
    %v747 = vld [vmem:[%s12 + $0x8] sm:$0xff]
    %749 = vset.pattern.permute.xlu0 0
    %750 = vperm.xlu0 %749, %v746
    %v751 = vpop.permute.xlu0 %750
    %754 = vset.pattern.permute.xlu0 0
    %755 = vperm.xlu0 %754, %v747
    %v756 = vpop.permute.xlu0 %755
    %v759 = vsel %vm166, %v744, 0
    %v762 = vsel %vm166, %v745, 0
    %764 = vmatprep.subr.mxu0 0.0
    %765 = vmatpush1.msra.mxu0 %v740
    %766 = vmatprep.subr.mxu0 0.0
    %767 = vmatpush1.msra.mxu0 %v741
    %768 = vmatprep.subr.mxu0 0.0
    %769 = vmatpush1.msra.mxu0 %v742
    %770 = vmatprep.subr.mxu0 0.0
    %771 = vmatpush1.msra.mxu0 %v743
    %772 = vmatprep.subr.mxu0 0.0
    %773 = vmatpush1.msra.mxu0 0.0
    %774 = vmatprep.subr.mxu0 0.0
    %775 = vmatpush1.msra.mxu0 0.0
    %776 = vmatprep.subr.mxu0 0.0
    %777 = vmatpush1.msra.mxu0 0.0
    %778 = vmatprep.subr.mxu0 0.0
    %779 = vmatpush1.msra.mxu0 0.0
    %780 = vmatprep.subr.mxu0 0.0
    %781 = vmatpush1.msra.mxu0 0.0
    %782 = vmatprep.subr.mxu0 0.0
    %783 = vmatpush1.msra.mxu0 0.0
    %784 = vmatprep.subr.mxu0 0.0
    %785 = vmatpush1.msra.mxu0 0.0
    %786 = vmatprep.subr.mxu0 0.0
    %787 = vmatpush1.msra.mxu0 0.0
    %788 = vmatprep.subr.mxu0 0.0
    %789 = vmatpush1.msra.mxu0 0.0
    %790 = vmatprep.subr.mxu0 0.0
    %791 = vmatpush1.msra.mxu0 0.0
    %792 = vmatprep.subr.mxu0 0.0
    %793 = vmatpush1.msra.mxu0 0.0
    %794 = vmatprep.subr.mxu0 0.0
    %795 = vmatpush1.msra.mxu0 0.0
    %796 = vmatprep.subr.mxu0 0.0
    %797 = vmatpush1.msra.mxu0 0.0
    %798 = vmatprep.subr.mxu0 0.0
    %799 = vmatpush1.msra.mxu0 0.0
    %800 = vmatprep.subr.mxu0 0.0
    %801 = vmatpush1.msra.mxu0 0.0
    %802 = vmatprep.subr.mxu0 0.0
    %803 = vmatpush1.msra.mxu0 0.0
    %804 = vmatprep.subr.mxu0 0.0
    %805 = vmatpush1.msra.mxu0 0.0
    %806 = vmatprep.subr.mxu0 0.0
    %807 = vmatpush1.msra.mxu0 0.0
    %808 = vmatprep.subr.mxu0 0.0
    %809 = vmatpush1.msra.mxu0 0.0
    %810 = vmatprep.subr.mxu0 0.0
    %811 = vmatpush1.msra.mxu0 0.0
    %812 = vmatprep.subr.mxu0 0.0
    %813 = vmatpush1.msra.mxu0 0.0
    %814 = vmatprep.subr.mxu0 0.0
    %815 = vmatpush1.msra.mxu0 0.0
    %816 = vmatprep.subr.mxu0 0.0
    %817 = vmatpush1.msra.mxu0 0.0
    %818 = vmatprep.subr.mxu0 0.0
    %819 = vmatpush1.msra.mxu0 0.0
    %820 = vmatprep.subr.mxu0 0.0
    %821 = vmatpush1.msra.mxu0 0.0
    %822 = vmatprep.subr.mxu0 0.0
    %823 = vmatpush1.msra.mxu0 0.0
    %824 = vmatprep.subr.mxu0 0.0
    %825 = vmatpush1.msra.mxu0 0.0
    %826 = vmatprep.subr.mxu0 0.0
    %827 = vmatpush1.msra.mxu0 0.0
    %828 = vmatprep.mubr.f32.mxu0 0.0
    %829 = vmatmul.mubr.f32.gmra.mrb[0].mxu0 %v759
    %v830 = vpop.f32.mrb[0].mxu0
    %v831 = vadd.f32 %v751, %v830
    %v832 = vpop.f32.mrb[0].mxu0
    %833 = vmatprep.mubr.f32.mxu0 0.0
    %834 = vmatmul.mubr.f32.gmra.mrb[0].mxu0 %v762
    %v835 = vpop.f32.mrb[0].mxu0
    %v836 = vadd.f32 %v756, %v835
    %v837 = vpop.f32.mrb[0].mxu0
    %838 = vdwg.mxu0
    %vm839 = vcmask 130048
    %840 = vst.msk [vmem:[#allocation2] sm:$0xff] %vm839, %v831
    %841 = vst.msk [vmem:[#allocation2 + $0x8] sm:$0xff] %vm839, %v836
    // Predicated region
    $region54: #{tpu_custom_call.1} parent=1 // pred_check
      _
    $region55: #{tpu_custom_call.1} parent=1 // pred_check_branch
      %843 = sbr.rel (0) target = $region57
    $region56: #{tpu_custom_call.1} parent=1 // pred_region
      %s845 = ssub.s32 256, 256
      %846 = vsyncadd [#allocation3], %s845
      %s847 = sshll.u32 [#allocation2], 4
      %s848 = int_to_ptr.vmem [resolvable:$true] %s847
      %853 = dma.vmem_to_hbm [thread:$0]  %s848, 256, %s13, [#allocation3], 128, 128, 8
    $region57: #{tpu_custom_call.1} parent=1 // pred_fallthru
      _
    // Predicated region
    $region58: #{tpu_custom_call.1} parent=1 // pred_check
      _
    $region59: #{tpu_custom_call.1} parent=1 // pred_check_branch
      %855 = sbr.rel (0) target = $region61
    $region60: #{tpu_custom_call.1} parent=1 // pred_region
      %856 = dma.done [#allocation3], 256
    $region61: #{tpu_custom_call.1} parent=1 // pred_fallthru
      _
    %857 = vsyncpa [#allocation3], 1

</llo_original>
